<compile_context>
chip_gen: v6e
topology: v6e:2x2x1
jax: 0.10.0
libtpu: 0.0.40
codegen_flags: <defaults>
</compile_context>

<pallas_src>
import functools

import jax
import jax.numpy as jnp
from jax.experimental import pallas as pl
from jax.experimental.pallas import tpu as pltpu


def _round_up(a, b):
    return -(-a // b) * b


def _cdiv(a, b):
    return -(-a // b)


@functools.lru_cache(maxsize=1)
def _chip_config():
    """Per-generation tuning: shard count, VMEM budgets, approx reciprocal."""
    kind = ""
    try:
        kind = jax.devices()[0].device_kind.lower()
    except Exception:
        pass
    if "v7" in kind or "7x" in kind:
        # v7x: 2 TensorCores/chip, 64 MiB physical VMEM/TC, compute-bound.
        return dict(
            num_shards=2,
            pair_budget=4 * 1024 * 1024,        # bytes for BOTH input blocks / step
            vmem_limit_bytes=40 * 1024 * 1024,  # headroom under 64 MiB physical
            approx_recip=True,                  # EUP slot; VPU is the bottleneck
        )
    # v5e / v6e: single TensorCore, 128 MiB physical VMEM, HBM-bound.
    return dict(
        num_shards=1,
        pair_budget=8 * 1024 * 1024,
        vmem_limit_bytes=64 * 1024 * 1024,
        approx_recip=False,
    )


def _sublane_packing(dtype):
    # 4-byte dtypes pack 8 rows per vreg, 2-byte 16, 1-byte 32.
    return max(8, 32 // jnp.dtype(dtype).itemsize)


def _pick_fold(nc, s, packing):
    """Fold spatial into rows so the row count hits full sublane packing."""
    if nc % packing == 0:
        return 1
    for r in range(2, packing + 1):
        if s % r == 0 and (nc * r) % packing == 0:
            return r
    for r in (8, 4, 2):  # best-effort f32-level occupancy fallback
        if s % r == 0 and (nc * r) % 8 == 0:
            return r
    return 1  # accept partial vreg occupancy (no clean fold exists)


def _pick_tile(rows, s_r, bytes_per_pair, pair_budget, num_shards):
    """Lane width per block: multiple of 128, sized from the VMEM budget."""
    tk = pair_budget // max(1, rows * bytes_per_pair)
    tk = max(128, (tk // 128) * 128)
    cap = _round_up(_cdiv(s_r, num_shards), 128)  # give every shard some work
    return max(128, min(tk, cap))


def _bce_dice_stats_kernel(p_ref, t_ref, out_ref, *, s_r, chunks_per_shard,
                           approx_recip):
    """Accumulate per-row [bce_sum, intersection, sigmoid_sum, target_sum]."""
    @pl.when(pl.program_id(1) == 0)
    def _():
        out_ref[...] = jnp.zeros_like(out_ref)

    rows, tk = p_ref.shape
    # Logical chunk along the (un-padded) spatial axis; the tail chunk may be
    # ragged and trailing shard chunks may be entirely past the end -> mask.
    chunk = pl.program_id(0) * chunks_per_shard + pl.program_id(1)
    valid = jnp.clip(s_r - chunk * tk, 0, tk)
    mask = jax.lax.broadcasted_iota(jnp.int32, (rows, tk), 1) < valid

    x = p_ref[...].astype(jnp.float32)   # logits
    y = t_ref[...].astype(jnp.float32)   # targets

    # Shared transcendentals: one exp, one log1p, one reciprocal per element.
    e = jnp.exp(-jnp.abs(x))             # exp(-|x|) in (0, 1]
    denom = 1.0 + e
    if approx_recip:
        r = pl.reciprocal(denom, approx=True)   # v7x: single EUP op
    else:
        r = 1.0 / denom
    softplus = jnp.log1p(e)              # log(1 + exp(-|x|))
    sig = jnp.where(x >= 0.0, r, e * r)  # sigmoid(x) without a second exp/div
    bce = jnp.maximum(x, 0.0) - x * y + softplus   # stable BCE-with-logits

    # Zero out lanes past the end of the real data (also discards any garbage
    # read from the partially out-of-bounds edge block).
    bce = jnp.where(mask, bce, 0.0)
    sig = jnp.where(mask, sig, 0.0)
    y = jnp.where(mask, y, 0.0)

    out_ref[:, 0:1] += bce.sum(axis=-1, keepdims=True)
    out_ref[:, 1:2] += (sig * y).sum(axis=-1, keepdims=True)
    out_ref[:, 2:3] += sig.sum(axis=-1, keepdims=True)
    out_ref[:, 3:4] += y.sum(axis=-1, keepdims=True)


@functools.partial(jax.jit, static_argnames=("weight_bce", "weight_dice", "smooth"))
def bce_dice_loss(pred, target, *, weight_bce=1.0, weight_dice=1.0, smooth=1.0):
    assert pred.shape == target.shape and pred.ndim == 5, "expected NCDHW inputs"
    n, c, d, h, w = pred.shape
    nc = n * c
    s = d * h * w

    cfg = _chip_config()

    packing = max(_sublane_packing(pred.dtype), _sublane_packing(target.dtype))
    fold = _pick_fold(nc, s, packing)
    rows = nc * fold
    s_r = s // fold

    # Stream native dtypes (no f32 upcast copy in HBM); kernel casts to f32.
    p2 = pred.reshape(rows, s_r)
    t2 = target.reshape(rows, s_r)

    bytes_per_pair = p2.dtype.itemsize + t2.dtype.itemsize
    tk = _pick_tile(rows, s_r, bytes_per_pair, cfg["pair_budget"], cfg["num_shards"])

    total_chunks = _cdiv(s_r, tk)
    num_shards = min(cfg["num_shards"], total_chunks)
    chunks_per_shard = _cdiv(total_chunks, num_shards)
    last_block = total_chunks - 1

    kernel = functools.partial(
        _bce_dice_stats_kernel,
        s_r=s_r,
        chunks_per_shard=chunks_per_shard,
        approx_recip=cfg["approx_recip"],
    )

    def in_map(p, k):
        # Clamp: a shard with a trailing empty chunk re-reads the last real
        # block; the kernel masks its contribution to exactly zero.
        return (0, jnp.minimum(p * chunks_per_shard + k, last_block))

    out_bytes = num_shards * rows * 4 * 4
    stats = pl.pallas_call(
        kernel,
        out_shape=jax.ShapeDtypeStruct((num_shards, rows, 4), jnp.float32),
        grid_spec=pltpu.PrefetchScalarGridSpec(
            num_scalar_prefetch=0,
            grid=(num_shards, chunks_per_shard),
            in_specs=[
                pl.BlockSpec((rows, tk), in_map),
                pl.BlockSpec((rows, tk), in_map),
            ],
            out_specs=pl.BlockSpec((None, rows, 4), lambda p, k: (p, 0, 0)),
        ),
        compiler_params=pltpu.CompilerParams(
            dimension_semantics=("parallel", "arbitrary"),
            vmem_limit_bytes=cfg["vmem_limit_bytes"],
        ),
        cost_estimate=pl.CostEstimate(
            flops=20 * nc * s,
            transcendentals=3 * nc * s,
            bytes_accessed=p2.size * p2.dtype.itemsize
            + t2.size * t2.dtype.itemsize
            + out_bytes,
        ),
    )(p2, t2)

    # Combine: sum over parallel shards, then un-fold rows back to (N*C).
    stats = stats.sum(axis=0).reshape(nc, fold, 4).sum(axis=1)   # (nc, 4)
    bce_sum = stats[:, 0]
    intersection = stats[:, 1]
    pred_sum = stats[:, 2]
    target_sum = stats[:, 3]

    # BCEWithLogitsLoss: mean over all elements.
    bce_loss = bce_sum.sum() / (nc * s)

    # DiceLoss: per-(N,C) dice, then 1 - mean.
    dice = (2.0 * intersection + smooth) / (pred_sum + target_sum + smooth)
    dice_loss = 1.0 - dice.mean()

    return weight_bce * bce_loss + weight_dice * dice_loss


def _reference(pred, target, weight_bce=1.0, weight_dice=1.0, smooth=1.0):
    pred = pred.astype(jnp.float32)
    target = target.astype(jnp.float32)
    bce = jnp.mean(jnp.maximum(pred, 0.0) - pred * target
                   + jnp.log1p(jnp.exp(-jnp.abs(pred))))
    sig = jax.nn.sigmoid(pred)
    inter = (sig * target).sum(axis=(2, 3, 4))
    union = sig.sum(axis=(2, 3, 4)) + target.sum(axis=(2, 3, 4))
    dice = (2.0 * inter + smooth) / (union + smooth)
    return weight_bce * bce + weight_dice * (1.0 - dice.mean())


if __name__ == "__main__":
    key = jax.random.PRNGKey(0)
    kp, kt = jax.random.split(key)

    # Approx reciprocal (v7x only) perturbs sigmoid by ~1e-3 rel; widen tol.
    tol = 5e-3 if _chip_config()["approx_recip"] else 1e-5

    # NCDHW: batch=2, channels=4, depth=4, spatial=8x8 (tile-aligned path).
    pred = jax.random.normal(kp, (2, 4, 4, 8, 8), dtype=jnp.float32)
    target = (jax.random.uniform(kt, (2, 4, 4, 8, 8)) > 0.5).astype(jnp.float32)
    loss = jax.block_until_ready(
        bce_dice_loss(pred, target, weight_bce=1.0, weight_dice=1.0, smooth=1.0))
    ref = _reference(pred, target)
    assert jnp.allclose(loss, ref, atol=tol, rtol=tol), (loss, ref)

    # Ragged spatial extent (exercises the in-kernel tail mask) with a narrow
    # bf16 target stream (halves target HBM bytes; kernel casts to f32).
    kp2, kt2 = jax.random.split(kt)
    pred2 = jax.random.normal(kp2, (1, 3, 3, 5, 7), dtype=jnp.float32)
    target2 = (jax.random.uniform(kt2, (1, 3, 3, 5, 7)) > 0.5).astype(jnp.bfloat16)
    loss2 = jax.block_until_ready(bce_dice_loss(pred2, target2))
    ref2 = _reference(pred2, target2)
    assert jnp.allclose(loss2, ref2, atol=tol, rtol=tol), (loss2, ref2)

    print("KERNEL_OK")
</pallas_src>

<mosaic_0001>
module attributes {stable_mosaic.version = 11 : i64} {
  func.func @_bce_dice_stats_kernel(%arg0: i32, %arg1: i32, %arg2: memref<8x256xf32, #tpu.memory_space<vmem>>, %arg3: memref<8x256xf32, #tpu.memory_space<vmem>>, %arg4: memref<1x8x4xf32, #tpu.memory_space<vmem>>) attributes {dimension_semantics = [#tpu.dimension_semantics<parallel>, #tpu.dimension_semantics<arbitrary>], iteration_bounds = array<i64: 1, 1>, scalar_prefetch = 0 : i64, scratch_operands = 0 : i64, tpu.core_type = #tpu.core_type<tc>, window_params = [{transform_indices = @transform_0, window_bounds = array<i64: 8, 256>}, {transform_indices = @transform_1, window_bounds = array<i64: 8, 256>}, {transform_indices = @transform_2, window_bounds = array<i64: 1, 8, 4>}]} {
    %c0_i32 = arith.constant 0 : i32
    %0 = arith.cmpi eq, %arg1, %c0_i32 : i32
    %1 = arith.extui %0 : i1 to i32
    %c0_i32_0 = arith.constant 0 : i32
    %2 = arith.cmpi ne, %1, %c0_i32_0 : i32
    scf.if %2 {
      %cst_39 = arith.constant 0.000000e+00 : f32
      %71 = vector.broadcast %cst_39 : f32 to vector<8x4xf32>
      %c0_40 = arith.constant 0 : index
      %c0_41 = arith.constant 0 : index
      %c0_42 = arith.constant 0 : index
      %72 = vector.load %arg4[%c0_40, %c0_41, %c0_42] : memref<1x8x4xf32, #tpu.memory_space<vmem>>, vector<1x8x4xf32>
      %73 = vector.shape_cast %72 : vector<1x8x4xf32> to vector<8x4xf32>
      %74 = vector.shape_cast %71 : vector<8x4xf32> to vector<1x8x4xf32>
      tpu.vector_store %arg4[%c0_40, %c0_41, %c0_42], %74 {strides = array<i32>} : memref<1x8x4xf32, #tpu.memory_space<vmem>>, vector<1x8x4xf32>,
    } else {
    }
    %c1_i32 = arith.constant 1 : i32
    %3 = arith.muli %arg0, %c1_i32 : i32
    %4 = arith.addi %3, %arg1 : i32
    %c256_i32 = arith.constant 256 : i32
    %5 = arith.muli %4, %c256_i32 : i32
    %c256_i32_1 = arith.constant 256 : i32
    %6 = arith.subi %c256_i32_1, %5 : i32
    %c0_i32_2 = arith.constant 0 : i32
    %c256_i32_3 = arith.constant 256 : i32
    %7 = arith.maxsi %c0_i32_2, %6 : i32
    %8 = arith.minsi %c256_i32_3, %7 : i32
    %9 = tpu.iota {dimensions = array<i32: 1>} : vector<8x256xi32>
    %10 = vector.broadcast %8 : i32 to vector<8x256xi32>
    %11 = arith.cmpi slt, %9, %10 : vector<8x256xi32>
    %c0 = arith.constant 0 : index
    %c0_4 = arith.constant 0 : index
    %12 = vector.load %arg2[%c0, %c0_4] : memref<8x256xf32, #tpu.memory_space<vmem>>, vector<8x256xf32>
    %c0_5 = arith.constant 0 : index
    %c0_6 = arith.constant 0 : index
    %13 = vector.load %arg3[%c0_5, %c0_6] : memref<8x256xf32, #tpu.memory_space<vmem>>, vector<8x256xf32>
    %14 = math.absf %12 : vector<8x256xf32>
    %cst = arith.constant 0.000000e+00 : f32
    %15 = vector.broadcast %cst : f32 to vector<8x256xf32>
    %16 = arith.subf %15, %14 : vector<8x256xf32>
    %17 = math.exp %16 : vector<8x256xf32>
    %cst_7 = arith.constant 1.000000e+00 : f32
    %18 = vector.broadcast %cst_7 : f32 to vector<8x256xf32>
    %19 = arith.addf %18, %17 : vector<8x256xf32>
    %cst_8 = arith.constant 1.000000e+00 : f32
    %20 = vector.broadcast %cst_8 : f32 to vector<8x256xf32>
    %21 = arith.divf %20, %19 : vector<8x256xf32>
    %22 = math.log1p %17 : vector<8x256xf32>
    %cst_9 = arith.constant 0.000000e+00 : f32
    %23 = vector.broadcast %cst_9 : f32 to vector<8x256xf32>
    %24 = arith.cmpf oge, %12, %23 : vector<8x256xf32>
    %25 = arith.mulf %17, %21 : vector<8x256xf32>
    %26 = arith.select %24, %21, %25 : vector<8x256xi1>, vector<8x256xf32>
    %cst_10 = arith.constant 0.000000e+00 : f32
    %27 = vector.broadcast %cst_10 : f32 to vector<8x256xf32>
    %28 = arith.maximumf %12, %27 : vector<8x256xf32>
    %29 = arith.mulf %12, %13 : vector<8x256xf32>
    %30 = arith.subf %28, %29 : vector<8x256xf32>
    %31 = arith.addf %30, %22 : vector<8x256xf32>
    %cst_11 = arith.constant 0.000000e+00 : f32
    %32 = vector.broadcast %cst_11 : f32 to vector<8x256xf32>
    %33 = arith.select %11, %31, %32 : vector<8x256xi1>, vector<8x256xf32>
    %cst_12 = arith.constant 0.000000e+00 : f32
    %34 = vector.broadcast %cst_12 : f32 to vector<8x256xf32>
    %35 = arith.select %11, %26, %34 : vector<8x256xi1>, vector<8x256xf32>
    %cst_13 = arith.constant 0.000000e+00 : f32
    %36 = vector.broadcast %cst_13 : f32 to vector<8x256xf32>
    %37 = arith.select %11, %13, %36 : vector<8x256xi1>, vector<8x256xf32>
    %c0_14 = arith.constant 0 : index
    %c0_15 = arith.constant 0 : index
    %c0_16 = arith.constant 0 : index
    %38 = vector.load %arg4[%c0_14, %c0_15, %c0_16] : memref<1x8x4xf32, #tpu.memory_space<vmem>>, vector<1x8x1xf32>
    %39 = vector.shape_cast %38 : vector<1x8x1xf32> to vector<8x1xf32>
    %cst_17 = arith.constant dense<0.000000e+00> : vector<8xf32>
    %40 = vector.multi_reduction <add>, %33, %cst_17 [1] : vector<8x256xf32> to vector<8xf32>
    %41 = vector.shape_cast %40 : vector<8xf32> to vector<8x1xf32>
    %42 = arith.addf %39, %41 : vector<8x1xf32>
    %c0_18 = arith.constant 0 : index
    %c0_19 = arith.constant 0 : index
    %c0_20 = arith.constant 0 : index
    %43 = vector.load %arg4[%c0_18, %c0_19, %c0_20] : memref<1x8x4xf32, #tpu.memory_space<vmem>>, vector<1x8x1xf32>
    %44 = vector.shape_cast %43 : vector<1x8x1xf32> to vector<8x1xf32>
    %45 = vector.shape_cast %42 : vector<8x1xf32> to vector<1x8x1xf32>
    tpu.vector_store %arg4[%c0_18, %c0_19, %c0_20], %45 {strides = array<i32>} : memref<1x8x4xf32, #tpu.memory_space<vmem>>, vector<1x8x1xf32>,
    %c0_21 = arith.constant 0 : index
    %c0_22 = arith.constant 0 : index
    %c1 = arith.constant 1 : index
    %46 = vector.load %arg4[%c0_21, %c0_22, %c1] : memref<1x8x4xf32, #tpu.memory_space<vmem>>, vector<1x8x1xf32>
    %47 = vector.shape_cast %46 : vector<1x8x1xf32> to vector<8x1xf32>
    %48 = arith.mulf %35, %37 : vector<8x256xf32>
    %cst_23 = arith.constant dense<0.000000e+00> : vector<8xf32>
    %49 = vector.multi_reduction <add>, %48, %cst_23 [1] : vector<8x256xf32> to vector<8xf32>
    %50 = vector.shape_cast %49 : vector<8xf32> to vector<8x1xf32>
    %51 = arith.addf %47, %50 : vector<8x1xf32>
    %c0_24 = arith.constant 0 : index
    %c0_25 = arith.constant 0 : index
    %c1_26 = arith.constant 1 : index
    %52 = vector.load %arg4[%c0_24, %c0_25, %c1_26] : memref<1x8x4xf32, #tpu.memory_space<vmem>>, vector<1x8x1xf32>
    %53 = vector.shape_cast %52 : vector<1x8x1xf32> to vector<8x1xf32>
    %54 = vector.shape_cast %51 : vector<8x1xf32> to vector<1x8x1xf32>
    tpu.vector_store %arg4[%c0_24, %c0_25, %c1_26], %54 {strides = array<i32>} : memref<1x8x4xf32, #tpu.memory_space<vmem>>, vector<1x8x1xf32>,
    %c0_27 = arith.constant 0 : index
    %c0_28 = arith.constant 0 : index
    %c2 = arith.constant 2 : index
    %55 = vector.load %arg4[%c0_27, %c0_28, %c2] : memref<1x8x4xf32, #tpu.memory_space<vmem>>, vector<1x8x1xf32>
    %56 = vector.shape_cast %55 : vector<1x8x1xf32> to vector<8x1xf32>
    %cst_29 = arith.constant dense<0.000000e+00> : vector<8xf32>
    %57 = vector.multi_reduction <add>, %35, %cst_29 [1] : vector<8x256xf32> to vector<8xf32>
    %58 = vector.shape_cast %57 : vector<8xf32> to vector<8x1xf32>
    %59 = arith.addf %56, %58 : vector<8x1xf32>
    %c0_30 = arith.constant 0 : index
    %c0_31 = arith.constant 0 : index
    %c2_32 = arith.constant 2 : index
    %60 = vector.load %arg4[%c0_30, %c0_31, %c2_32] : memref<1x8x4xf32, #tpu.memory_space<vmem>>, vector<1x8x1xf32>
    %61 = vector.shape_cast %60 : vector<1x8x1xf32> to vector<8x1xf32>
    %62 = vector.shape_cast %59 : vector<8x1xf32> to vector<1x8x1xf32>
    tpu.vector_store %arg4[%c0_30, %c0_31, %c2_32], %62 {strides = array<i32>} : memref<1x8x4xf32, #tpu.memory_space<vmem>>, vector<1x8x1xf32>,
    %c0_33 = arith.constant 0 : index
    %c0_34 = arith.constant 0 : index
    %c3 = arith.constant 3 : index
    %63 = vector.load %arg4[%c0_33, %c0_34, %c3] : memref<1x8x4xf32, #tpu.memory_space<vmem>>, vector<1x8x1xf32>
    %64 = vector.shape_cast %63 : vector<1x8x1xf32> to vector<8x1xf32>
    %cst_35 = arith.constant dense<0.000000e+00> : vector<8xf32>
    %65 = vector.multi_reduction <add>, %37, %cst_35 [1] : vector<8x256xf32> to vector<8xf32>
    %66 = vector.shape_cast %65 : vector<8xf32> to vector<8x1xf32>
    %67 = arith.addf %64, %66 : vector<8x1xf32>
    %c0_36 = arith.constant 0 : index
    %c0_37 = arith.constant 0 : index
    %c3_38 = arith.constant 3 : index
    %68 = vector.load %arg4[%c0_36, %c0_37, %c3_38] : memref<1x8x4xf32, #tpu.memory_space<vmem>>, vector<1x8x1xf32>
    %69 = vector.shape_cast %68 : vector<1x8x1xf32> to vector<8x1xf32>
    %70 = vector.shape_cast %67 : vector<8x1xf32> to vector<1x8x1xf32>
    tpu.vector_store %arg4[%c0_36, %c0_37, %c3_38], %70 {strides = array<i32>} : memref<1x8x4xf32, #tpu.memory_space<vmem>>, vector<1x8x1xf32>,
    return
  }
  func.func @transform_0(%arg0: i32, %arg1: i32) -> (i32, i32) {
    %c1_i32 = arith.constant 1 : i32
    %0 = arith.muli %arg0, %c1_i32 : i32
    %1 = arith.addi %0, %arg1 : i32
    %c0_i32 = arith.constant 0 : i32
    %2 = arith.minsi %1, %c0_i32 : i32
    %c0_i32_0 = arith.constant 0 : i32
    %c0_i32_1 = arith.constant 0 : i32
    return %c0_i32_0, %2 : i32, i32
  }
  func.func @transform_1(%arg0: i32, %arg1: i32) -> (i32, i32) {
    %c1_i32 = arith.constant 1 : i32
    %0 = arith.muli %arg0, %c1_i32 : i32
    %1 = arith.addi %0, %arg1 : i32
    %c0_i32 = arith.constant 0 : i32
    %2 = arith.minsi %1, %c0_i32 : i32
    %c0_i32_0 = arith.constant 0 : i32
    %c0_i32_1 = arith.constant 0 : i32
    return %c0_i32_0, %2 : i32, i32
  }
  func.func @transform_2(%arg0: i32, %arg1: i32) -> (i32, i32, i32) {
    %c0_i32 = arith.constant 0 : i32
    %c0_i32_0 = arith.constant 0 : i32
    %c0_i32_1 = arith.constant 0 : i32
    return %arg0, %c0_i32, %c0_i32_0 : i32, i32, i32
  }
}

</mosaic_0001>

<llo_original>
// kernel: bce_dice_loss.1
$region0: #{bce_dice_loss.1}
  #allocation0 [shape = 'u32[]', space=smem, size = 0x4, offset = 0x4, fixed_abs, tag = 'smem constant byte address 0x4 - core index']
  #allocation1 [shape = 'u32[144,128]{1,0:T(1,128)}', space=vmem, size = 0x12000, scoped, tag = 'internal scratch']
  %s0 = inlined_call_operand.vmem [shape: f32[8,256], index: 0, kind: input, shape index: {}]
  %s1 = inlined_call_operand.vmem [shape: f32[8,256], index: 1, kind: input, shape index: {}]
  %s2 = inlined_call_operand.vmem [shape: f32[1,8,4], index: 2, kind: output, shape index: {}]
  %s3 = sld [smem:[#allocation0]]
  $region22: #{bce_dice_loss.1} parent=0
    _
  %s5 = ssub.s32 1, %s3
  %s6 = scalar_select 0, %s5, %s3
  // Predicated region
  $region2: #{bce_dice_loss.1} parent=0 // pred_check
    _
  $region3: #{bce_dice_loss.1} parent=0 // pred_check_branch
    %8 = sbr.rel (0) target = $region5
  $region4: #{bce_dice_loss.1} parent=0 // pred_region
    %s9 = sadd.s32 0, 0
    %p10 = scmp.lt.s32.totalorder %s9, 0
    %s11 = scalar_select %p10, %s9, 0
    %s12 = smul.u32 2, %s11
    %p13 = scmp.lt.s32.totalorder %s12, 1
    %s14 = scalar_select %p13, %s12, 1
    %s15 = smul.addr %s14, 8
    %s16 = scalar_lea.vmem %s0, %s15
    %s17 = sadd.s32 0, 0
    %p18 = scmp.lt.s32.totalorder %s17, 0
    %s19 = scalar_select %p18, %s17, 0
    %s20 = smul.u32 2, %s19
  $region5: #{bce_dice_loss.1} parent=0 // pred_fallthru
    _
  // Predicated region
  $region6: #{bce_dice_loss.1} parent=0 // pred_check
    _
  $region7: #{bce_dice_loss.1} parent=0 // pred_check_branch
    %22 = sbr.rel (0) target = $region9
  $region8: #{bce_dice_loss.1} parent=0 // pred_region
    %s23 = sadd.s32 0, 0
    %p24 = scmp.lt.s32.totalorder %s23, 0
    %s25 = scalar_select %p24, %s23, 0
    %s26 = smul.u32 2, %s25
    %p27 = scmp.lt.s32.totalorder %s26, 1
    %s28 = scalar_select %p27, %s26, 1
    %s29 = smul.addr %s28, 8
    %s30 = scalar_lea.vmem %s1, %s29
    %s31 = sadd.s32 0, 0
    %p32 = scmp.lt.s32.totalorder %s31, 0
    %s33 = scalar_select %p32, %s31, 0
    %s34 = smul.u32 2, %s33
  $region9: #{bce_dice_loss.1} parent=0 // pred_fallthru
    _
  %s35 = sadd.s32 0, 0
  %p36 = scmp.lt.s32.totalorder %s35, 0
  %s37 = scalar_select %p36, %s35, 0
  %s38 = smul.u32 2, %s37
  %p39 = scmp.lt.s32.totalorder %s38, 1
  %s40 = scalar_select %p39, %s38, 1
  %s41 = smul.addr %s40, 8
  %s42 = scalar_lea.vmem %s0, %s41
  %s43 = sadd.s32 0, 0
  %p44 = scmp.lt.s32.totalorder %s43, 0
  %s45 = scalar_select %p44, %s43, 0
  %s46 = smul.u32 2, %s45
  %p47 = scmp.lt.s32.totalorder %s46, 1
  %s48 = scalar_select %p47, %s46, 1
  %s49 = smul.addr %s48, 8
  %s50 = scalar_lea.vmem %s1, %s49
  %s51 = sadd.s32 0, 0
  %p52 = scmp.lt.s32.totalorder %s51, 0
  %s53 = scalar_select %p52, %s51, 0
  %s54 = smul.u32 2, %s53
  %p55 = scmp.lt.s32.totalorder %s54, 1
  %s56 = scalar_select %p55, %s54, 1
  %s57 = smul.addr %s56, 8
  %s58 = scalar_lea.vmem %s0, %s57
  %s59 = sadd.s32 0, 0
  %p60 = scmp.lt.s32.totalorder %s59, 0
  %s61 = scalar_select %p60, %s59, 0
  %s62 = smul.u32 2, %s61
  %s63 = sadd.s32 0, 0
  %p64 = scmp.lt.s32.totalorder %s63, 0
  %s65 = scalar_select %p64, %s63, 0
  %s66 = smul.u32 2, %s65
  %p67 = scmp.lt.s32.totalorder %s66, 1
  %s68 = scalar_select %p67, %s66, 1
  %s69 = smul.addr %s68, 8
  %s70 = scalar_lea.vmem %s1, %s69
  %s71 = sadd.s32 0, 0
  %p72 = scmp.lt.s32.totalorder %s71, 0
  %s73 = scalar_select %p72, %s71, 0
  %s74 = smul.u32 2, %s73
  %p75 = scmp.eq.s32.totalorder 0, 0
  // Predicated region
  $region10: #{bce_dice_loss.1} parent=0 // pred_check
    %p76 = pneg %p75
  $region11: #{bce_dice_loss.1} parent=0 // pred_check_branch
    %78 = sbr.rel (%p76) target = $region13
  $region12: #{bce_dice_loss.1} parent=0 // pred_region
    %vm79 = vcmask 31744
    %80 = vst.msk [vmem:[%s2] sm:$0xff] %vm79, 0.0
  $region13: #{bce_dice_loss.1} parent=0 // pred_fallthru
    _
  %s81 = sadd.s32 0, 0
  %s82 = smul.u32 %s81, 256
  %s83 = ssub.s32 256, %s82
  %p84 = scmp.gt.s32.totalorder %s83, 0
  %s85 = scalar_select %p84, %s83, 0
  %p86 = scmp.lt.s32.totalorder %s85, 256
  %s87 = scalar_select %p86, %s85, 256
  %v88 = vlaneseq
  %v89 = vand.u32 %v88, 127
  %v90 = vadd.s32 %v89, 128
  %v91 = vstv %s87
  %vm92 = vcmp.lt.s32.totalorder %v89, %v91
  %vm93 = vcmp.lt.s32.totalorder %v90, %v91
  %v94 = vld [vmem:[%s58] sm:$0xff]
  %v95 = vld [vmem:[%s58 + $0x8] sm:$0xff]
  %v96 = vld [vmem:[%s70] sm:$0xff]
  %v97 = vld [vmem:[%s70 + $0x8] sm:$0xff]
  %v98 = vand.u32 2147483647, %v94
  %v99 = vand.u32 2147483647, %v95
  %v100 = vsub.f32 0.0, %v98
  %v101 = vsub.f32 0.0, %v99
  %v102 = vmul.f32 %v100, 1.442695
  %v103 = vpow.pop %v102
  %v104 = vmul.f32 %v101, 1.442695
  %v105 = vpow.pop %v104
  %v106 = vadd.f32 %v103, 1.0
  %v107 = vadd.f32 %v105, 1.0
  %v108 = vrcp.pop %v106
  %v109 = vmul.f32 1.0, %v108
  %v110 = vrcp.pop %v107
  %v111 = vmul.f32 1.0, %v110
  %v112 = vadd.f32 %v103, 1.0
  %v113 = vlog2.pop %v112
  %v114 = vmul.f32 %v113, 0.6931472
  %v115 = vmul.f32 -0.5, %v103
  %v116 = vadd.f32 %v115, 1.0
  %v117 = vmul.f32 %v116, %v103
  %v118 = vand.u32 2147483647, %v103
  %vm119 = vcmp.lt.f32.partialorder %v118, 0.0004427343
  %v120 = vsel %vm119, %v117, %v114
  %v121 = vadd.f32 %v105, 1.0
  %v122 = vlog2.pop %v121
  %v123 = vmul.f32 %v122, 0.6931472
  %v124 = vmul.f32 -0.5, %v105
  %v125 = vadd.f32 %v124, 1.0
  %v126 = vmul.f32 %v125, %v105
  %v127 = vand.u32 2147483647, %v105
  %vm128 = vcmp.lt.f32.partialorder %v127, 0.0004427343
  %v129 = vsel %vm128, %v126, %v123
  %vm130 = vcmp.ge.f32.partialorder %v94, 0.0
  %vm131 = vcmp.ge.f32.partialorder %v95, 0.0
  %v132 = vmul.f32 %v103, %v109
  %v133 = vmul.f32 %v105, %v111
  %v134 = vsel %vm130, %v109, %v132
  %v135 = vsel %vm131, %v111, %v133
  %v136 = vmax.f32 %v94, 0.0
  %v137 = vmax.f32 %v95, 0.0
  %v138 = vmul.f32 %v94, %v96
  %v139 = vmul.f32 %v95, %v97
  %v140 = vsub.f32 %v136, %v138
  %v141 = vsub.f32 %v137, %v139
  %v142 = vadd.f32 %v140, %v120
  %v143 = vadd.f32 %v141, %v129
  %v144 = vsel %vm92, %v142, 0.0
  %v145 = vsel %vm93, %v143, 0.0
  %v146 = vsel %vm92, %v134, 0.0
  %v147 = vsel %vm93, %v135, 0.0
  %v148 = vsel %vm92, %v96, 0.0
  %v149 = vsel %vm93, %v97, 0.0
  %v150 = vld [vmem:[%s2] sm:$0xff]
  %v151 = vadd.f32 %v144, %v145
  %152 = vadd.xlane.f32.xlu0 %v151
  %v153 = vpop.xlane.xlu0 %152
  %v154 = vadd.f32 %v150, %v153
  %vm155 = vcmask 7168
  %156 = vst.msk [vmem:[%s2] sm:$0xff] %vm155, %v154
  %v157 = vld [vmem:[%s2] sm:$0xff]
  %v158 = vmul.f32 %v146, %v148
  %v159 = vmul.f32 %v147, %v149
  %v160 = vadd.f32 %v158, %v159
  %161 = vadd.xlane.f32.xlu0 %v160
  %v162 = vpop.xlane.xlu0 %161
  %v163 = vadd.f32 %v157, %v162
  %vm164 = vcmask 15368
  %165 = vst.msk [vmem:[%s2] sm:$0xff] %vm164, %v163
  %v166 = vld [vmem:[%s2] sm:$0xff]
  %v167 = vadd.f32 %v146, %v147
  %168 = vadd.xlane.f32.xlu0 %v167
  %v169 = vpop.xlane.xlu0 %168
  %v170 = vadd.f32 %v166, %v169
  %vm171 = vcmask 23568
  %172 = vst.msk [vmem:[%s2] sm:$0xff] %vm171, %v170
  %v173 = vld [vmem:[%s2] sm:$0xff]
  %v174 = vadd.f32 %v148, %v149
  %175 = vadd.xlane.f32.xlu0 %v174
  %v176 = vpop.xlane.xlu0 %175
  %v177 = vadd.f32 %v173, %v176
  %vm178 = vcmask 31768
  %179 = vst.msk [vmem:[%s2] sm:$0xff] %vm178, %v177
  // Predicated region
  $region14: #{bce_dice_loss.1} parent=0 // pred_check
    _
  $region15: #{bce_dice_loss.1} parent=0 // pred_check_branch
    %181 = sbr.rel (0) target = $region17
  $region16: #{bce_dice_loss.1} parent=0 // pred_region
    _
  $region17: #{bce_dice_loss.1} parent=0 // pred_fallthru
    _
  // Predicated region
  $region18: #{bce_dice_loss.1} parent=0 // pred_check
    _
  $region19: #{bce_dice_loss.1} parent=0 // pred_check_branch
    %183 = sbr.rel (0) target = $region21
  $region20: #{bce_dice_loss.1} parent=0 // pred_region
    _
  $region21: #{bce_dice_loss.1} parent=0 // pred_fallthru
    _

</llo_original>
